<compile_context>
chip_gen: v7x
topology: tpu7x:2x2x1
jax: 0.10.0
libtpu: 0.0.40
codegen_flags: <defaults>
</compile_context>

<pallas_src>
import functools
import math

import jax
import jax.numpy as jnp
from jax.experimental import pallas as pl
from jax.experimental.pallas import tpu as pltpu
from jax.scipy.linalg import block_diag


def _round_up(x, m):
    return (x + m - 1) // m * m


def _cdiv(a, b):
    return (a + b - 1) // b


# ---------------------------------------------------------------------------
# Kernel
# ---------------------------------------------------------------------------
def _lerp_stacked_kernel(x_ref, wcat_ref, bcat_ref, e_ref, r_ref, out_ref,
                         acc_ref, *, num_stack, slog):
    """One (batch-tile, K-tile) step of the LerpStackedFeatures forward.

    x_ref    : (TB, TK)      flattened input tile (MXU dtype)
    wcat_ref : (TK, NWP)     K-slice of [logitW^T | 0 | blockdiag(Wf) | 0]
    bcat_ref : (1,  NWP)     fused biases (f32)
    e_ref    : (SLOG, NWP)   coef -> lane-expanded-coef selector (f32)
    r_ref    : (NWP, DOUT)   stack-sum selector (f32)
    out_ref  : (TB, DOUT)
    acc_ref  : (TB, NWP) f32 K-reduction accumulator (VMEM scratch)
    """
    k = pl.program_id(1)

    @pl.when(k == 0)
    def _init():
        acc_ref[...] = jnp.zeros_like(acc_ref)

    # Fused MXU pass: logits (first lane group) + per-stack features (rest).
    acc_ref[...] += jnp.dot(x_ref[...], wcat_ref[...],
                            preferred_element_type=jnp.float32)

    @pl.when(k == pl.num_programs(1) - 1)
    def _finalize():
        raw = acc_ref[...] + bcat_ref[...]                 # (TB, NWP), f32

        # Stable softmax over the stack; the logit group is its own
        # 128-lane-aligned slab, padded lanes masked to -inf.
        logits = raw[:, :slog]
        lane = jax.lax.broadcasted_iota(jnp.int32, logits.shape, 1)
        logits = jnp.where(lane < num_stack, logits, -jnp.inf)
        logits = logits - jnp.max(logits, axis=-1, keepdims=True)
        p = jnp.exp(logits)
        coef = p * pl.reciprocal(jnp.sum(p, axis=-1, keepdims=True),
                                 approx=False)             # (TB, SLOG)

        # Softmax-weighted sum over the stack, kept on the MXU:
        #   coef_exp[b, SLOG + s*Dout + o] = coef[b, s]
        #   out[b, o] = sum_s coef[b, s] * raw[b, SLOG + s*Dout + o]
        coef_exp = jnp.dot(coef, e_ref[...],
                           preferred_element_type=jnp.float32)
        out = jnp.dot(coef_exp * raw, r_ref[...],
                      preferred_element_type=jnp.float32)
        out_ref[...] = out.astype(out_ref.dtype)
        # TODO(synk): if Dout << 128 and profiling shows a store-bound gap,
        # pack 128//Dout rows per output row here for lane-dense stores.


# ---------------------------------------------------------------------------
# One-time fused parameter slab (hoisted out of the per-call path)
# ---------------------------------------------------------------------------
def fuse_lerp_params(params, mm_dtype=None):
    """Build the lane-aligned fused weight slab + selectors once per param set."""
    wf = params["feature_linear_weight"]      # (S, Din, Dout)
    bf = params["feature_linear_bias"]        # (S, Dout)
    wl = params["logit_coef_weight_t"]        # (S*Din, S)
    bl = params["logit_coef_bias"]            # (1, S)

    S, Din, Dout = wf.shape
    K = S * Din
    if mm_dtype is None:
        mm_dtype = wf.dtype
    slog = _round_up(S, 128)                  # logit group: own 128-lane slab
    feat = S * Dout
    featp = _round_up(feat, 128)              # feature group padded to 128
    nwp = slog + featp

    f32 = jnp.float32
    bdiag = block_diag(*[wf[s] for s in range(S)]).astype(f32)   # (K, S*Dout)
    wcat = jnp.concatenate(
        [wl.astype(f32),
         jnp.zeros((K, slog - S), f32),
         bdiag,
         jnp.zeros((K, featp - feat), f32)], axis=1).astype(mm_dtype)
    bcat = jnp.concatenate(
        [bl.reshape(1, S).astype(f32),
         jnp.zeros((1, slog - S), f32),
         bf.reshape(1, feat).astype(f32),
         jnp.zeros((1, featp - feat), f32)], axis=1)             # (1, NWP)
    # coef -> lane-expanded-coef selector (zeros over logit/pad lanes).
    e_sel = jnp.zeros((slog, nwp), f32).at[:S, slog:slog + feat].set(
        jnp.kron(jnp.eye(S, dtype=f32), jnp.ones((1, Dout), f32)))
    # stack-sum selector (stacked identities over the feature lanes).
    r_sel = jnp.zeros((nwp, Dout), f32).at[slog:slog + feat, :].set(
        jnp.tile(jnp.eye(Dout, dtype=f32), (S, 1)))

    return {"wcat": wcat, "bcat": bcat, "e_sel": e_sel, "r_sel": r_sel,
            "num_stack": S, "dim_in": Din, "dim_out": Dout, "slog": slog}


# ---------------------------------------------------------------------------
# Wrapper
# ---------------------------------------------------------------------------
def lerp_stacked_features(stacked_features, fused, *, batch_tile=512):
    """JAX/Pallas equivalent of LerpStackedFeatures.forward.

    stacked_features: (*batch, S, N_in)  (or (S, N_in) with no batch)
    fused: output of fuse_lerp_params().
    Returns (*batch, N_out)  (or (N_out,) if no batch).
    """
    wcat, bcat = fused["wcat"], fused["bcat"]
    e_sel, r_sel = fused["e_sel"], fused["r_sel"]
    S, Din, Dout = fused["num_stack"], fused["dim_in"], fused["dim_out"]
    slog = fused["slog"]
    K, nwp = wcat.shape

    no_batch = stacked_features.ndim == 2
    if no_batch:
        stacked_features = stacked_features[None]
    batch_shape = stacked_features.shape[:-2]
    assert stacked_features.shape[-2:] == (S, Din)
    out_dtype = stacked_features.dtype

    # (B, S*Din) row-major view: lane-dense K, no in-kernel reshape needed.
    x_flat = stacked_features.reshape(-1, K)
    if x_flat.dtype != wcat.dtype:
        x_flat = x_flat.astype(wcat.dtype)
    B = x_flat.shape[0]

    # ---- K (reduction) tiling ---------------------------------------------
    KMAX = 2048
    if K <= KMAX:
        tk = K
    else:
        tk = 0
        for cand in range(KMAX - KMAX % 128, 127, -128):
            if K % cand == 0:
                tk = cand
                break
        if tk == 0:
            tk = K    # no 128-aligned divisor: fall back to full-K slab.
    gk = K // tk

    # ---- batch tiling: at most 8*grid "virtual" pad rows (partial blocks) --
    gb = max(1, _cdiv(B, batch_tile))
    tb = _round_up(_cdiv(B, gb), 8)

    # ---- VMEM budget / vmem_limit_bytes ------------------------------------
    x_bytes = jnp.dtype(wcat.dtype).itemsize
    out_bytes = jnp.dtype(out_dtype).itemsize

    def _tile_bytes(rows, cols, nbytes):
        return _round_up(rows, 8) * _round_up(cols, 128) * nbytes

    def _vmem_need(tb_):
        wbuf = 1 if gk == 1 else 2
        return (2 * _tile_bytes(tb_, tk, x_bytes)          # x (double buffered)
                + wbuf * _tile_bytes(tk, nwp, x_bytes)     # fused weight slab
                + _tile_bytes(1, nwp, 4)                   # bcat
                + _tile_bytes(slog, nwp, 4)                # e_sel
                + _tile_bytes(nwp, Dout, 4)                # r_sel
                + 2 * _tile_bytes(tb_, Dout, out_bytes)    # out (double buffered)
                + _tile_bytes(tb_, nwp, 4)                 # acc scratch
                + 2 * _tile_bytes(tb_, nwp, 4))            # raw/coef_exp temps

    try:
        vmem_cap = int(pltpu.get_tpu_info().vmem_capacity_bytes)
    except Exception:
        vmem_cap = 64 << 20                                # v7x-safe default
    budget = min(vmem_cap // 2, 48 << 20)
    while tb > 8 and _vmem_need(tb) > budget:
        tb = max(8, _round_up(_cdiv(tb, 2), 8))
    gb = _cdiv(B, tb)
    vmem_limit = int(min(max(_vmem_need(tb) + (8 << 20), 32 << 20),
                         int(vmem_cap * 0.9)))

    kernel = functools.partial(_lerp_stacked_kernel, num_stack=S, slog=slog)

    if gk == 1:   # weight slab is grid-invariant -> single buffer
        wcat_spec = pl.BlockSpec((tk, nwp), lambda i, k: (0, 0),
                                 pipeline_mode=pl.Buffered(1))
    else:
        wcat_spec = pl.BlockSpec((tk, nwp), lambda i, k: (k, 0))

    out = pl.pallas_call(
        kernel,
        out_shape=jax.ShapeDtypeStruct((B, Dout), out_dtype),
        grid_spec=pltpu.PrefetchScalarGridSpec(
            num_scalar_prefetch=0,
            grid=(gb, gk),
            in_specs=[
                pl.BlockSpec((tb, tk), lambda i, k: (i, k)),        # x tile
                wcat_spec,                                          # weights
                pl.BlockSpec((1, nwp), lambda i, k: (0, 0),
                             pipeline_mode=pl.Buffered(1)),         # biases
                pl.BlockSpec((slog, nwp), lambda i, k: (0, 0),
                             pipeline_mode=pl.Buffered(1)),         # coef expander
                pl.BlockSpec((nwp, Dout), lambda i, k: (0, 0),
                             pipeline_mode=pl.Buffered(1)),         # stack reducer
            ],
            out_specs=pl.BlockSpec((tb, Dout), lambda i, k: (i, 0)),
            scratch_shapes=[pltpu.VMEM((tb, nwp), jnp.float32)],
        ),
        compiler_params=pltpu.CompilerParams(
            dimension_semantics=("parallel", "arbitrary"),
            vmem_limit_bytes=vmem_limit),
    )(x_flat, wcat, bcat, e_sel, r_sel)

    out = out.reshape(*batch_shape, Dout)
    if no_batch:
        out = out[0]
    return out


# ---------------------------------------------------------------------------
# Parameter init + pure-JAX reference
# ---------------------------------------------------------------------------
def init_params(key, dim_in, dim_out, num_stack, dtype=jnp.float32):
    """Deterministic parameter init matching the PyTorch module's shapes."""
    k1, k2, k3, k4 = jax.random.split(key, 4)
    scale = dim_out ** (-0.5)
    feature_linear_weight = (
        jax.random.normal(k1, (num_stack, dim_in, dim_out), dtype) * scale)
    feature_linear_bias = (
        jax.random.normal(k2, (num_stack, dim_out), dtype) * scale)
    fan_in = num_stack * dim_in
    bound = 1.0 / math.sqrt(fan_in)
    logit_w = jax.random.uniform(k3, (num_stack, fan_in), dtype, -bound, bound)
    logit_b = jax.random.uniform(k4, (num_stack,), dtype, -bound, bound)
    return {
        "feature_linear_weight": feature_linear_weight,
        "feature_linear_bias": feature_linear_bias,
        "logit_coef_weight_t": logit_w.T,          # (S*Din, S) for x @ W^T
        "logit_coef_bias": logit_b[None, :],       # (1, S)
    }


def _reference(stacked_features, params):
    """Plain-JAX reference (mirrors the PyTorch forward)."""
    wf = params["feature_linear_weight"]
    bf = params["feature_linear_bias"]
    wl = params["logit_coef_weight_t"]
    bl = params["logit_coef_bias"]
    no_batch = stacked_features.ndim == 2
    if no_batch:
        stacked_features = stacked_features[None]
    batch_shape = stacked_features.shape[:-2]
    S, Din = stacked_features.shape[-2:]
    x = stacked_features.reshape(-1, S, Din)
    B = x.shape[0]
    logit = x.reshape(B, S * Din) @ wl + bl
    coef = jax.nn.softmax(logit, axis=-1)
    feat = jnp.einsum("sio,bsi->bso", wf, x) + bf[None]
    out = jnp.einsum("bs,bsi->bi", coef, feat)
    out = out.reshape(*batch_shape, -1)
    if no_batch:
        out = out[0]
    return out


if __name__ == "__main__":
    dim_in, dim_out, num_stack = 32, 16, 4
    key = jax.random.PRNGKey(0)
    kp, kx = jax.random.split(key)

    params = init_params(kp, dim_in, dim_out, num_stack)
    fused = fuse_lerp_params(params)          # built once per parameter set

    # batched input: (*batch, S, N_in) = (2, 8, 4, 32) -> B = 16
    x = jax.random.normal(kx, (2, 8, num_stack, dim_in), jnp.float32)
    out = jax.block_until_ready(lerp_stacked_features(x, fused))
    ref = _reference(x, params)
    assert out.shape == (2, 8, dim_out), out.shape
    assert jnp.allclose(out, ref, atol=1e-4, rtol=1e-4), (
        float(jnp.max(jnp.abs(out - ref))))

    # batch needing a partial last block: B=5 (rows 5..7 of the block dropped)
    x3 = jax.random.normal(jax.random.PRNGKey(2), (5, num_stack, dim_in),
                           jnp.float32)
    out3 = jax.block_until_ready(lerp_stacked_features(x3, fused))
    ref3 = _reference(x3, params)
    assert out3.shape == (5, dim_out)
    assert jnp.allclose(out3, ref3, atol=1e-4, rtol=1e-4)

    # no-batch path: (S, N_in)
    x2 = jax.random.normal(jax.random.PRNGKey(1), (num_stack, dim_in),
                           jnp.float32)
    out2 = jax.block_until_ready(lerp_stacked_features(x2, fused))
    ref2 = _reference(x2, params)
    assert out2.shape == (dim_out,)
    assert jnp.allclose(out2, ref2, atol=1e-4, rtol=1e-4)

    print("KERNEL_OK")
</pallas_src>

<mosaic_0001>
module attributes {stable_mosaic.version = 11 : i64} {
  func.func @_lerp_stacked_kernel(%arg0: i32, %arg1: i32, %arg2: memref<16x128xf32, #tpu.memory_space<vmem>>, %arg3: memref<128x256xf32, #tpu.memory_space<vmem>>, %arg4: memref<1x256xf32, #tpu.memory_space<vmem>>, %arg5: memref<128x256xf32, #tpu.memory_space<vmem>>, %arg6: memref<256x16xf32, #tpu.memory_space<vmem>>, %arg7: memref<16x16xf32, #tpu.memory_space<vmem>>, %arg8: memref<16x256xf32, #tpu.memory_space<vmem>>) attributes {dimension_semantics = [#tpu.dimension_semantics<parallel>, #tpu.dimension_semantics<arbitrary>], iteration_bounds = array<i64: 1, 1>, scalar_prefetch = 0 : i64, scratch_operands = 1 : i64, tpu.core_type = #tpu.core_type<tc>, window_params = [{transform_indices = @transform_0, window_bounds = array<i64: 16, 128>}, {pipeline_mode = #tpu.pipeline_mode<synchronous>, transform_indices = @transform_1, window_bounds = array<i64: 128, 256>}, {pipeline_mode = #tpu.pipeline_mode<synchronous>, transform_indices = @transform_2, window_bounds = array<i64: 1, 256>}, {pipeline_mode = #tpu.pipeline_mode<synchronous>, transform_indices = @transform_3, window_bounds = array<i64: 128, 256>}, {pipeline_mode = #tpu.pipeline_mode<synchronous>, transform_indices = @transform_4, window_bounds = array<i64: 256, 16>}, {transform_indices = @transform_5, window_bounds = array<i64: 16, 16>}]} {
    %c0_i32 = arith.constant 0 : i32
    %0 = arith.cmpi eq, %arg1, %c0_i32 : i32
    %1 = arith.extui %0 : i1 to i32
    %c0_i32_0 = arith.constant 0 : i32
    %2 = arith.cmpi ne, %1, %c0_i32_0 : i32
    scf.if %2 {
      %cst_10 = arith.constant 0.000000e+00 : f32
      %12 = vector.broadcast %cst_10 : f32 to vector<16x256xf32>
      %c0_11 = arith.constant 0 : index
      %c0_12 = arith.constant 0 : index
      %13 = vector.load %arg8[%c0_11, %c0_12] : memref<16x256xf32, #tpu.memory_space<vmem>>, vector<16x256xf32>
      tpu.vector_store %arg8[%c0_11, %c0_12], %12 {strides = array<i32>} : memref<16x256xf32, #tpu.memory_space<vmem>>, vector<16x256xf32>,
    } else {
    }
    %c0 = arith.constant 0 : index
    %c0_1 = arith.constant 0 : index
    %3 = vector.load %arg8[%c0, %c0_1] : memref<16x256xf32, #tpu.memory_space<vmem>>, vector<16x256xf32>
    %c0_2 = arith.constant 0 : index
    %c0_3 = arith.constant 0 : index
    %4 = vector.load %arg2[%c0_2, %c0_3] : memref<16x128xf32, #tpu.memory_space<vmem>>, vector<16x128xf32>
    %c0_4 = arith.constant 0 : index
    %c0_5 = arith.constant 0 : index
    %5 = vector.load %arg3[%c0_4, %c0_5] : memref<128x256xf32, #tpu.memory_space<vmem>>, vector<128x256xf32>
    %cst = arith.constant dense<0.000000e+00> : vector<16x256xf32>
    %6 = tpu.matmul %4, %5, %cst {dimension_numbers = #tpu.dot_dimension_numbers<[1], [0], [0], [1], [0, 0, 1, 1], [], []>} : vector<16x128xf32>, vector<128x256xf32>, vector<16x256xf32> -> vector<16x256xf32>
    %7 = arith.addf %3, %6 : vector<16x256xf32>
    %c0_6 = arith.constant 0 : index
    %c0_7 = arith.constant 0 : index
    %8 = vector.load %arg8[%c0_6, %c0_7] : memref<16x256xf32, #tpu.memory_space<vmem>>, vector<16x256xf32>
    tpu.vector_store %arg8[%c0_6, %c0_7], %7 {strides = array<i32>} : memref<16x256xf32, #tpu.memory_space<vmem>>, vector<16x256xf32>,
    %c0_i32_8 = arith.constant 0 : i32
    %9 = arith.cmpi eq, %arg1, %c0_i32_8 : i32
    %10 = arith.extui %9 : i1 to i32
    %c0_i32_9 = arith.constant 0 : i32
    %11 = arith.cmpi ne, %10, %c0_i32_9 : i32
    scf.if %11 {
      %c0_10 = arith.constant 0 : index
      %c0_11 = arith.constant 0 : index
      %12 = vector.load %arg8[%c0_10, %c0_11] : memref<16x256xf32, #tpu.memory_space<vmem>>, vector<16x256xf32>
      %c0_12 = arith.constant 0 : index
      %c0_13 = arith.constant 0 : index
      %13 = vector.load %arg4[%c0_12, %c0_13] : memref<1x256xf32, #tpu.memory_space<vmem>>, vector<1x256xf32>
      %14 = vector.broadcast %13 : vector<1x256xf32> to vector<16x256xf32>
      %15 = arith.addf %12, %14 : vector<16x256xf32>
      %16 = vector.extract_strided_slice %15 {offsets = [0, 0], sizes = [16, 128], strides = [1, 1]} : vector<16x256xf32> to vector<16x128xf32>
      %17 = tpu.iota {dimensions = array<i32: 1>} : vector<16x128xi32>
      %c4_i32 = arith.constant 4 : i32
      %18 = vector.broadcast %c4_i32 : i32 to vector<16x128xi32>
      %19 = arith.cmpi slt, %17, %18 : vector<16x128xi32>
      %cst_14 = arith.constant 0xFF800000 : f32
      %20 = vector.broadcast %cst_14 : f32 to vector<16x128xf32>
      %21 = arith.select %19, %16, %20 : vector<16x128xi1>, vector<16x128xf32>
      %cst_15 = arith.constant dense<0xFF800000> : vector<16xf32>
      %22 = vector.multi_reduction <maximumf>, %21, %cst_15 [1] : vector<16x128xf32> to vector<16xf32>
      %23 = vector.shape_cast %22 : vector<16xf32> to vector<16x1xf32>
      %24 = vector.broadcast %23 : vector<16x1xf32> to vector<16x128xf32>
      %25 = arith.subf %21, %24 : vector<16x128xf32>
      %26 = math.exp %25 : vector<16x128xf32>
      %cst_16 = arith.constant dense<0.000000e+00> : vector<16xf32>
      %27 = vector.multi_reduction <add>, %26, %cst_16 [1] : vector<16x128xf32> to vector<16xf32>
      %28 = vector.shape_cast %27 : vector<16xf32> to vector<16x1xf32>
      %29 = tpu.reciprocal %28 : vector<16x1xf32> -> vector<16x1xf32>
      %30 = vector.broadcast %29 : vector<16x1xf32> to vector<16x128xf32>
      %31 = arith.mulf %26, %30 : vector<16x128xf32>
      %c0_17 = arith.constant 0 : index
      %c0_18 = arith.constant 0 : index
      %32 = vector.load %arg5[%c0_17, %c0_18] : memref<128x256xf32, #tpu.memory_space<vmem>>, vector<128x256xf32>
      %cst_19 = arith.constant dense<0.000000e+00> : vector<16x256xf32>
      %33 = tpu.matmul %31, %32, %cst_19 {dimension_numbers = #tpu.dot_dimension_numbers<[1], [0], [0], [1], [0, 0, 1, 1], [], []>} : vector<16x128xf32>, vector<128x256xf32>, vector<16x256xf32> -> vector<16x256xf32>
      %34 = arith.mulf %33, %15 : vector<16x256xf32>
      %c0_20 = arith.constant 0 : index
      %c0_21 = arith.constant 0 : index
      %35 = vector.load %arg6[%c0_20, %c0_21] : memref<256x16xf32, #tpu.memory_space<vmem>>, vector<256x16xf32>
      %cst_22 = arith.constant dense<0.000000e+00> : vector<16x16xf32>
      %36 = tpu.matmul %34, %35, %cst_22 {dimension_numbers = #tpu.dot_dimension_numbers<[1], [0], [0], [1], [0, 0, 1, 1], [], []>} : vector<16x256xf32>, vector<256x16xf32>, vector<16x16xf32> -> vector<16x16xf32>
      %c0_23 = arith.constant 0 : index
      %c0_24 = arith.constant 0 : index
      %37 = vector.load %arg7[%c0_23, %c0_24] : memref<16x16xf32, #tpu.memory_space<vmem>>, vector<16x16xf32>
      tpu.vector_store %arg7[%c0_23, %c0_24], %36 {strides = array<i32>} : memref<16x16xf32, #tpu.memory_space<vmem>>, vector<16x16xf32>,
    } else {
    }
    return
  }
  func.func @transform_0(%arg0: i32, %arg1: i32) -> (i32, i32) {
    %c0_i32 = arith.constant 0 : i32
    return %arg0, %arg1 : i32, i32
  }
  func.func @transform_1(%arg0: i32, %arg1: i32) -> (i32, i32) {
    %c0_i32 = arith.constant 0 : i32
    %c0_i32_0 = arith.constant 0 : i32
    %c0_i32_1 = arith.constant 0 : i32
    return %c0_i32, %c0_i32_0 : i32, i32
  }
  func.func @transform_2(%arg0: i32, %arg1: i32) -> (i32, i32) {
    %c0_i32 = arith.constant 0 : i32
    %c0_i32_0 = arith.constant 0 : i32
    %c0_i32_1 = arith.constant 0 : i32
    return %c0_i32, %c0_i32_0 : i32, i32
  }
  func.func @transform_3(%arg0: i32, %arg1: i32) -> (i32, i32) {
    %c0_i32 = arith.constant 0 : i32
    %c0_i32_0 = arith.constant 0 : i32
    %c0_i32_1 = arith.constant 0 : i32
    return %c0_i32, %c0_i32_0 : i32, i32
  }
  func.func @transform_4(%arg0: i32, %arg1: i32) -> (i32, i32) {
    %c0_i32 = arith.constant 0 : i32
    %c0_i32_0 = arith.constant 0 : i32
    %c0_i32_1 = arith.constant 0 : i32
    return %c0_i32, %c0_i32_0 : i32, i32
  }
  func.func @transform_5(%arg0: i32, %arg1: i32) -> (i32, i32) {
    %c0_i32 = arith.constant 0 : i32
    %c0_i32_0 = arith.constant 0 : i32
    return %arg0, %c0_i32 : i32, i32
  }
}

</mosaic_0001>

<llo_original>
// kernel: tpu_custom_call.1
$region0: #{tpu_custom_call.1}
  #allocation0 [shape = 'u32[]', space=smem, size = 0x4, offset = 0x4, fixed_abs, tag = 'smem constant byte address 0x4 - core index']
  #allocation1 [shape = 'u32[144,128]{1,0:T(1,128)}', space=vmem, size = 0x12000, scoped, tag = 'internal scratch']
  #allocation2 [shape = 'f32[16,256]{1,0:T(8,128)}', space=vmem, size = 0x4000, scoped, tag = 'scratch operand']
  %s0 = inlined_call_operand.vmem [shape: f32[16,128], index: 0, kind: input, shape index: {}]
  %s1 = inlined_call_operand.vmem [shape: f32[128,256], index: 1, kind: input, shape index: {}]
  %s2 = inlined_call_operand.vmem [shape: f32[1,256], index: 2, kind: input, shape index: {}]
  %s3 = inlined_call_operand.hbm [shape: f32[128,256], index: 3, kind: input, shape index: {}]
  %s4 = inlined_call_operand.vmem [shape: f32[256,16], index: 4, kind: input, shape index: {}]
  %s5 = inlined_call_operand.hbm [shape: f32[16,16], index: 5, kind: output, shape index: {}]
  %s6 = sld [smem:[#allocation0]]
  $region42: #{tpu_custom_call.1} parent=0
    _
  %s8 = ssub.s32 1, %s6
  %s9 = scalar_select 0, %s8, %s6
  $region1: #{tpu_custom_call.1} parent=0
    #allocation3 [shape = 'u8[131072]{0}', space=vmem, size = 0x20000, scoped, tag = 'input window, operand 3, single buffered']
    #allocation4 [shape = 's32[1]{0}', space=sflag, size = 0x4, scoped, tag = 'scoped memory for tpu_custom_call.1']
    #allocation5 [shape = 's32[1]{0}', space=sflag, size = 0x4, scoped, tag = 'scoped memory for tpu_custom_call.1']
    #allocation6 [shape = 'u8[8192]{0}', space=vmem, size = 0x2000, scoped, tag = 'output window, operand 0, single buffered']
    %10 = vsyncpa [#allocation4], 0
    %11 = vsyncpa [#allocation5], 0
    // Predicated region
    $region2: #{tpu_custom_call.1} parent=1 // pred_check
      _
    $region3: #{tpu_custom_call.1} parent=1 // pred_check_branch
      %13 = sbr.rel (0) target = $region5
    $region4: #{tpu_custom_call.1} parent=1 // pred_region
      _
    $region5: #{tpu_custom_call.1} parent=1 // pred_fallthru
      _
    // Predicated region
    $region6: #{tpu_custom_call.1} parent=1 // pred_check
      _
    $region7: #{tpu_custom_call.1} parent=1 // pred_check_branch
      %15 = sbr.rel (0) target = $region9
    $region8: #{tpu_custom_call.1} parent=1 // pred_region
      _
    $region9: #{tpu_custom_call.1} parent=1 // pred_fallthru
      _
    // Predicated region
    $region10: #{tpu_custom_call.1} parent=1 // pred_check
      _
    $region11: #{tpu_custom_call.1} parent=1 // pred_check_branch
      %17 = sbr.rel (0) target = $region13
    $region12: #{tpu_custom_call.1} parent=1 // pred_region
      _
    $region13: #{tpu_custom_call.1} parent=1 // pred_fallthru
      _
    // Predicated region
    $region14: #{tpu_custom_call.1} parent=1 // pred_check
      _
    $region15: #{tpu_custom_call.1} parent=1 // pred_check_branch
      %19 = sbr.rel (0) target = $region17
    $region16: #{tpu_custom_call.1} parent=1 // pred_region
      %s21 = ssub.s32 4096, 4096
      %22 = vsyncadd [#allocation4], %s21
      %s23 = sshll.u32 [#allocation3], 4
      %s24 = int_to_ptr.vmem [resolvable:$true] %s23
      %29 = dma.hbm_to_vmem [thread:$0]  %s3, 4096, %s24, [#allocation4], 256, 256, 16
    $region17: #{tpu_custom_call.1} parent=1 // pred_fallthru
      _
    // Predicated region
    $region18: #{tpu_custom_call.1} parent=1 // pred_check
      _
    $region19: #{tpu_custom_call.1} parent=1 // pred_check_branch
      %31 = sbr.rel (0) target = $region21
    $region20: #{tpu_custom_call.1} parent=1 // pred_region
      _
    $region21: #{tpu_custom_call.1} parent=1 // pred_fallthru
      _
    // Predicated region
    $region22: #{tpu_custom_call.1} parent=1 // pred_check
      _
    $region23: #{tpu_custom_call.1} parent=1 // pred_check_branch
      %33 = sbr.rel (0) target = $region25
    $region24: #{tpu_custom_call.1} parent=1 // pred_region
      %34 = dma.done [#allocation4], 4096
    $region25: #{tpu_custom_call.1} parent=1 // pred_fallthru
      _
    %p35 = scmp.eq.s32.totalorder 0, 0
    // Predicated region
    $region26: #{tpu_custom_call.1} parent=1 // pred_check
      %p36 = pneg %p35
    $region27: #{tpu_custom_call.1} parent=1 // pred_check_branch
      %38 = sbr.rel (%p36) target = $region29
    $region28: #{tpu_custom_call.1} parent=1 // pred_region
      %39 = vst [vmem:[#allocation2] sm:$0xff] 0.0
      %40 = vst [vmem:[#allocation2 + $0x8] sm:$0xff] 0.0
      %41 = vst [vmem:[#allocation2 + $0x10] sm:$0xff] 0.0
      %42 = vst [vmem:[#allocation2 + $0x18] sm:$0xff] 0.0
    $region29: #{tpu_custom_call.1} parent=1 // pred_fallthru
      _
    %v43 = vld [vmem:[#allocation2] sm:$0xff]
    %v44 = vld [vmem:[#allocation2 + $0x8] sm:$0xff]
    %v45 = vld [vmem:[#allocation2 + $0x10] sm:$0xff]
    %v46 = vld [vmem:[#allocation2 + $0x18] sm:$0xff]
    %v47 = vld [vmem:[%s0] sm:$0xff]
    %v48 = vld [vmem:[%s0 + $0x8] sm:$0xff]
    %v49 = vld [vmem:[%s1] sm:$0xff]
    %v50 = vld [vmem:[%s1 + $0x8] sm:$0xff]
    %v51 = vld [vmem:[%s1 + $0x10] sm:$0xff]
    %v52 = vld [vmem:[%s1 + $0x18] sm:$0xff]
    %v53 = vld [vmem:[%s1 + $0x20] sm:$0xff]
    %v54 = vld [vmem:[%s1 + $0x28] sm:$0xff]
    %v55 = vld [vmem:[%s1 + $0x30] sm:$0xff]
    %v56 = vld [vmem:[%s1 + $0x38] sm:$0xff]
    %v57 = vld [vmem:[%s1 + $0x40] sm:$0xff]
    %v58 = vld [vmem:[%s1 + $0x48] sm:$0xff]
    %v59 = vld [vmem:[%s1 + $0x50] sm:$0xff]
    %v60 = vld [vmem:[%s1 + $0x58] sm:$0xff]
    %v61 = vld [vmem:[%s1 + $0x60] sm:$0xff]
    %v62 = vld [vmem:[%s1 + $0x68] sm:$0xff]
    %v63 = vld [vmem:[%s1 + $0x70] sm:$0xff]
    %v64 = vld [vmem:[%s1 + $0x78] sm:$0xff]
    %v65 = vld [vmem:[%s1 + $0x80] sm:$0xff]
    %v66 = vld [vmem:[%s1 + $0x88] sm:$0xff]
    %v67 = vld [vmem:[%s1 + $0x90] sm:$0xff]
    %v68 = vld [vmem:[%s1 + $0x98] sm:$0xff]
    %v69 = vld [vmem:[%s1 + $0xa0] sm:$0xff]
    %v70 = vld [vmem:[%s1 + $0xa8] sm:$0xff]
    %v71 = vld [vmem:[%s1 + $0xb0] sm:$0xff]
    %v72 = vld [vmem:[%s1 + $0xb8] sm:$0xff]
    %v73 = vld [vmem:[%s1 + $0xc0] sm:$0xff]
    %v74 = vld [vmem:[%s1 + $0xc8] sm:$0xff]
    %v75 = vld [vmem:[%s1 + $0xd0] sm:$0xff]
    %v76 = vld [vmem:[%s1 + $0xd8] sm:$0xff]
    %v77 = vld [vmem:[%s1 + $0xe0] sm:$0xff]
    %v78 = vld [vmem:[%s1 + $0xe8] sm:$0xff]
    %v79 = vld [vmem:[%s1 + $0xf0] sm:$0xff]
    %v80 = vld [vmem:[%s1 + $0xf8] sm:$0xff]
    %81 = vmatprep.subr.mxu0 %v50
    %82 = vmatpush1.msra.mxu0 %v49
    %83 = vmatprep.subr.mxu0 %v52
    %84 = vmatpush1.msra.mxu0 %v51
    %85 = vmatprep.subr.mxu0 %v54
    %86 = vmatpush1.msra.mxu0 %v53
    %87 = vmatprep.subr.mxu0 %v56
    %88 = vmatpush1.msra.mxu0 %v55
    %89 = vmatprep.subr.mxu0 %v58
    %90 = vmatpush1.msra.mxu0 %v57
    %91 = vmatprep.subr.mxu0 %v60
    %92 = vmatpush1.msra.mxu0 %v59
    %93 = vmatprep.subr.mxu0 %v62
    %94 = vmatpush1.msra.mxu0 %v61
    %95 = vmatprep.subr.mxu0 %v64
    %96 = vmatpush1.msra.mxu0 %v63
    %97 = vmatprep.subr.mxu0 %v66
    %98 = vmatpush1.msra.mxu0 %v65
    %99 = vmatprep.subr.mxu0 %v68
    %100 = vmatpush1.msra.mxu0 %v67
    %101 = vmatprep.subr.mxu0 %v70
    %102 = vmatpush1.msra.mxu0 %v69
    %103 = vmatprep.subr.mxu0 %v72
    %104 = vmatpush1.msra.mxu0 %v71
    %105 = vmatprep.subr.mxu0 %v74
    %106 = vmatpush1.msra.mxu0 %v73
    %107 = vmatprep.subr.mxu0 %v76
    %108 = vmatpush1.msra.mxu0 %v75
    %109 = vmatprep.subr.mxu0 %v78
    %110 = vmatpush1.msra.mxu0 %v77
    %111 = vmatprep.subr.mxu0 %v80
    %112 = vmatpush1.msra.mxu0 %v79
    %113 = vmatprep.subr.mxu0 0.0
    %114 = vmatpush1.msra.mxu0 0.0
    %115 = vmatprep.subr.mxu0 0.0
    %116 = vmatpush1.msra.mxu0 0.0
    %117 = vmatprep.subr.mxu0 0.0
    %118 = vmatpush1.msra.mxu0 0.0
    %119 = vmatprep.subr.mxu0 0.0
    %120 = vmatpush1.msra.mxu0 0.0
    %121 = vmatprep.subr.mxu0 0.0
    %122 = vmatpush1.msra.mxu0 0.0
    %123 = vmatprep.subr.mxu0 0.0
    %124 = vmatpush1.msra.mxu0 0.0
    %125 = vmatprep.subr.mxu0 0.0
    %126 = vmatpush1.msra.mxu0 0.0
    %127 = vmatprep.subr.mxu0 0.0
    %128 = vmatpush1.msra.mxu0 0.0
    %129 = vmatprep.subr.mxu0 0.0
    %130 = vmatpush1.msra.mxu0 0.0
    %131 = vmatprep.subr.mxu0 0.0
    %132 = vmatpush1.msra.mxu0 0.0
    %133 = vmatprep.subr.mxu0 0.0
    %134 = vmatpush1.msra.mxu0 0.0
    %135 = vmatprep.subr.mxu0 0.0
    %136 = vmatpush1.msra.mxu0 0.0
    %137 = vmatprep.subr.mxu0 0.0
    %138 = vmatpush1.msra.mxu0 0.0
    %139 = vmatprep.subr.mxu0 0.0
    %140 = vmatpush1.msra.mxu0 0.0
    %141 = vmatprep.subr.mxu0 0.0
    %142 = vmatpush1.msra.mxu0 0.0
    %143 = vmatprep.subr.mxu0 0.0
    %144 = vmatpush1.msra.mxu0 0.0
    %145 = vmatprep.mubr.f32.mxu0 0.0
    %146 = vmatmul.mubr.f32.gmra.mrb[0].mxu0 %v47
    %v147 = vpop.f32.mrb[0].mxu0
    %v148 = vadd.f32 0.0, %v147
    %v149 = vpop.f32.mrb[0].mxu0
    %v150 = vadd.f32 0.0, %v149
    %151 = vmatprep.mubr.f32.mxu0 0.0
    %152 = vmatmul.mubr.f32.gmra.mrb[0].mxu0 %v48
    %v153 = vpop.f32.mrb[0].mxu0
    %v154 = vadd.f32 0.0, %v153
    %v155 = vpop.f32.mrb[0].mxu0
    %v156 = vadd.f32 0.0, %v155
    %157 = vdwg.mxu0
    %v158 = vadd.f32 %v43, %v148
    %v159 = vadd.f32 %v44, %v150
    %v160 = vadd.f32 %v45, %v154
    %v161 = vadd.f32 %v46, %v156
    %162 = vst [vmem:[#allocation2] sm:$0xff] %v158
    %163 = vst [vmem:[#allocation2 + $0x8] sm:$0xff] %v159
    %164 = vst [vmem:[#allocation2 + $0x10] sm:$0xff] %v160
    %165 = vst [vmem:[#allocation2 + $0x18] sm:$0xff] %v161
    // Predicated region
    $region30: #{tpu_custom_call.1} parent=1 // pred_check
      %p166 = pneg %p35
    $region31: #{tpu_custom_call.1} parent=1 // pred_check_branch
      %168 = sbr.rel (%p166) target = $region33
    $region32: #{tpu_custom_call.1} parent=1 // pred_region
      %v169 = vld [vmem:[#allocation2] sm:$0xff]
      %v170 = vld [vmem:[#allocation2 + $0x8] sm:$0xff]
      %v171 = vld [vmem:[#allocation2 + $0x10] sm:$0xff]
      %v172 = vld [vmem:[#allocation2 + $0x18] sm:$0xff]
      %v173 = vld [vmem:[%s2] sm:$0x3]
      %v175 = vlaneseq
      %v176 = vshrl.u32 %v175, 7
      %v177 = vsub.s32 0, %v176
      %v178 = vrot.slane %v173, %v177
      %v179 = vlaneseq
      %v180 = vshrl.u32 %v179, 7
      %v181 = vsub.s32 1, %v180
      %v182 = vrot.slane %v173, %v181
      %v185 = vadd.f32 %v169, %v178
      %v186 = vadd.f32 %v170, %v182
      %v187 = vadd.f32 %v171, %v178
      %v188 = vadd.f32 %v172, %v182
      %v189 = vlaneseq
      %v190 = vand.u32 %v189, 127
      %vm191 = vcmp.lt.s32.totalorder %v190, 4
      %v192 = vsel %vm191, %v185, -inf
      %v193 = vsel %vm191, %v187, -inf
      %194 = vmax.xlane.f32.xlu0 %v192
      %v195 = vpop.xlane.xlu0 %194
      %196 = vmax.xlane.f32.xlu0 %v193
      %v197 = vpop.xlane.xlu0 %196
      %v198 = vsub.f32 %v192, %v195
      %v199 = vsub.f32 %v193, %v197
      %v200 = vmul.f32 %v198, 1.442695
      %v201 = vpow.pop %v200
      %v202 = vmul.f32 %v199, 1.442695
      %v203 = vpow.pop %v202
      %204 = vadd.xlane.f32.xlu0 %v201
      %v205 = vpop.xlane.xlu0 %204
      %206 = vadd.xlane.f32.xlu0 %v203
      %v207 = vpop.xlane.xlu0 %206
      %v208 = vrcp.pop %v205
      %v209 = vrcp.pop %v207
      %v210 = vmul.f32 %v201, %v208
      %v211 = vmul.f32 %v203, %v209
      %v212 = vld [vmem:[#allocation3] sm:$0xff]
      %v213 = vld [vmem:[#allocation3 + $0x8] sm:$0xff]
      %v214 = vld [vmem:[#allocation3 + $0x10] sm:$0xff]
      %v215 = vld [vmem:[#allocation3 + $0x18] sm:$0xff]
      %v216 = vld [vmem:[#allocation3 + $0x20] sm:$0xff]
      %v217 = vld [vmem:[#allocation3 + $0x28] sm:$0xff]
      %v218 = vld [vmem:[#allocation3 + $0x30] sm:$0xff]
      %v219 = vld [vmem:[#allocation3 + $0x38] sm:$0xff]
      %v220 = vld [vmem:[#allocation3 + $0x40] sm:$0xff]
      %v221 = vld [vmem:[#allocation3 + $0x48] sm:$0xff]
      %v222 = vld [vmem:[#allocation3 + $0x50] sm:$0xff]
      %v223 = vld [vmem:[#allocation3 + $0x58] sm:$0xff]
      %v224 = vld [vmem:[#allocation3 + $0x60] sm:$0xff]
      %v225 = vld [vmem:[#allocation3 + $0x68] sm:$0xff]
      %v226 = vld [vmem:[#allocation3 + $0x70] sm:$0xff]
      %v227 = vld [vmem:[#allocation3 + $0x78] sm:$0xff]
      %v228 = vld [vmem:[#allocation3 + $0x80] sm:$0xff]
      %v229 = vld [vmem:[#allocation3 + $0x88] sm:$0xff]
      %v230 = vld [vmem:[#allocation3 + $0x90] sm:$0xff]
      %v231 = vld [vmem:[#allocation3 + $0x98] sm:$0xff]
      %v232 = vld [vmem:[#allocation3 + $0xa0] sm:$0xff]
      %v233 = vld [vmem:[#allocation3 + $0xa8] sm:$0xff]
      %v234 = vld [vmem:[#allocation3 + $0xb0] sm:$0xff]
      %v235 = vld [vmem:[#allocation3 + $0xb8] sm:$0xff]
      %v236 = vld [vmem:[#allocation3 + $0xc0] sm:$0xff]
      %v237 = vld [vmem:[#allocation3 + $0xc8] sm:$0xff]
      %v238 = vld [vmem:[#allocation3 + $0xd0] sm:$0xff]
      %v239 = vld [vmem:[#allocation3 + $0xd8] sm:$0xff]
      %v240 = vld [vmem:[#allocation3 + $0xe0] sm:$0xff]
      %v241 = vld [vmem:[#allocation3 + $0xe8] sm:$0xff]
      %v242 = vld [vmem:[#allocation3 + $0xf0] sm:$0xff]
      %v243 = vld [vmem:[#allocation3 + $0xf8] sm:$0xff]
      %244 = vmatprep.subr.mxu0 %v213
      %245 = vmatpush1.msra.mxu0 %v212
      %246 = vmatprep.subr.mxu0 %v215
      %247 = vmatpush1.msra.mxu0 %v214
      %248 = vmatprep.subr.mxu0 %v217
      %249 = vmatpush1.msra.mxu0 %v216
      %250 = vmatprep.subr.mxu0 %v219
      %251 = vmatpush1.msra.mxu0 %v218
      %252 = vmatprep.subr.mxu0 %v221
      %253 = vmatpush1.msra.mxu0 %v220
      %254 = vmatprep.subr.mxu0 %v223
      %255 = vmatpush1.msra.mxu0 %v222
      %256 = vmatprep.subr.mxu0 %v225
      %257 = vmatpush1.msra.mxu0 %v224
      %258 = vmatprep.subr.mxu0 %v227
      %259 = vmatpush1.msra.mxu0 %v226
      %260 = vmatprep.subr.mxu0 %v229
      %261 = vmatpush1.msra.mxu0 %v228
      %262 = vmatprep.subr.mxu0 %v231
      %263 = vmatpush1.msra.mxu0 %v230
      %264 = vmatprep.subr.mxu0 %v233
      %265 = vmatpush1.msra.mxu0 %v232
      %266 = vmatprep.subr.mxu0 %v235
      %267 = vmatpush1.msra.mxu0 %v234
      %268 = vmatprep.subr.mxu0 %v237
      %269 = vmatpush1.msra.mxu0 %v236
      %270 = vmatprep.subr.mxu0 %v239
      %271 = vmatpush1.msra.mxu0 %v238
      %272 = vmatprep.subr.mxu0 %v241
      %273 = vmatpush1.msra.mxu0 %v240
      %274 = vmatprep.subr.mxu0 %v243
      %275 = vmatpush1.msra.mxu0 %v242
      %276 = vmatprep.subr.mxu0 0.0
      %277 = vmatpush1.msra.mxu0 0.0
      %278 = vmatprep.subr.mxu0 0.0
      %279 = vmatpush1.msra.mxu0 0.0
      %280 = vmatprep.subr.mxu0 0.0
      %281 = vmatpush1.msra.mxu0 0.0
      %282 = vmatprep.subr.mxu0 0.0
      %283 = vmatpush1.msra.mxu0 0.0
      %284 = vmatprep.subr.mxu0 0.0
      %285 = vmatpush1.msra.mxu0 0.0
      %286 = vmatprep.subr.mxu0 0.0
      %287 = vmatpush1.msra.mxu0 0.0
      %288 = vmatprep.subr.mxu0 0.0
      %289 = vmatpush1.msra.mxu0 0.0
      %290 = vmatprep.subr.mxu0 0.0
      %291 = vmatpush1.msra.mxu0 0.0
      %292 = vmatprep.subr.mxu0 0.0
      %293 = vmatpush1.msra.mxu0 0.0
      %294 = vmatprep.subr.mxu0 0.0
      %295 = vmatpush1.msra.mxu0 0.0
      %296 = vmatprep.subr.mxu0 0.0
      %297 = vmatpush1.msra.mxu0 0.0
      %298 = vmatprep.subr.mxu0 0.0
      %299 = vmatpush1.msra.mxu0 0.0
      %300 = vmatprep.subr.mxu0 0.0
      %301 = vmatpush1.msra.mxu0 0.0
      %302 = vmatprep.subr.mxu0 0.0
      %303 = vmatpush1.msra.mxu0 0.0
      %304 = vmatprep.subr.mxu0 0.0
      %305 = vmatpush1.msra.mxu0 0.0
      %306 = vmatprep.subr.mxu0 0.0
      %307 = vmatpush1.msra.mxu0 0.0
      %308 = vmatprep.mubr.f32.mxu0 0.0
      %309 = vmatmul.mubr.f32.gmra.mrb[0].mxu0 %v210
      %v310 = vpop.f32.mrb[0].mxu0
      %v311 = vadd.f32 0.0, %v310
      %v312 = vpop.f32.mrb[0].mxu0
      %v313 = vadd.f32 0.0, %v312
      %314 = vmatprep.mubr.f32.mxu0 0.0
      %315 = vmatmul.mubr.f32.gmra.mrb[0].mxu0 %v211
      %v316 = vpop.f32.mrb[0].mxu0
      %v317 = vadd.f32 0.0, %v316
      %v318 = vpop.f32.mrb[0].mxu0
      %v319 = vadd.f32 0.0, %v318
      %320 = vdwg.mxu0
      %v321 = vmul.f32 %v311, %v185
      %v322 = vmul.f32 %v313, %v186
      %v323 = vmul.f32 %v317, %v187
      %v324 = vmul.f32 %v319, %v188
      %v325 = vld [vmem:[%s4] sm:$0xff]
      %v326 = vld [vmem:[%s4 + $0x8] sm:$0xff]
      %v327 = vld [vmem:[%s4 + $0x10] sm:$0xff]
      %v328 = vld [vmem:[%s4 + $0x18] sm:$0xff]
      %v329 = vld [vmem:[%s4 + $0x20] sm:$0xff]
      %v330 = vld [vmem:[%s4 + $0x28] sm:$0xff]
      %v331 = vld [vmem:[%s4 + $0x30] sm:$0xff]
      %v332 = vld [vmem:[%s4 + $0x38] sm:$0xff]
      %v333 = vld [vmem:[%s4 + $0x40] sm:$0xff]
      %v334 = vld [vmem:[%s4 + $0x48] sm:$0xff]
      %v335 = vld [vmem:[%s4 + $0x50] sm:$0xff]
      %v336 = vld [vmem:[%s4 + $0x58] sm:$0xff]
      %v337 = vld [vmem:[%s4 + $0x60] sm:$0xff]
      %v338 = vld [vmem:[%s4 + $0x68] sm:$0xff]
      %v339 = vld [vmem:[%s4 + $0x70] sm:$0xff]
      %v340 = vld [vmem:[%s4 + $0x78] sm:$0xff]
      %v341 = vld [vmem:[%s4 + $0x80] sm:$0xff]
      %v342 = vld [vmem:[%s4 + $0x88] sm:$0xff]
      %v343 = vld [vmem:[%s4 + $0x90] sm:$0xff]
      %v344 = vld [vmem:[%s4 + $0x98] sm:$0xff]
      %v345 = vld [vmem:[%s4 + $0xa0] sm:$0xff]
      %v346 = vld [vmem:[%s4 + $0xa8] sm:$0xff]
      %v347 = vld [vmem:[%s4 + $0xb0] sm:$0xff]
      %v348 = vld [vmem:[%s4 + $0xb8] sm:$0xff]
      %v349 = vld [vmem:[%s4 + $0xc0] sm:$0xff]
      %v350 = vld [vmem:[%s4 + $0xc8] sm:$0xff]
      %v351 = vld [vmem:[%s4 + $0xd0] sm:$0xff]
      %v352 = vld [vmem:[%s4 + $0xd8] sm:$0xff]
      %v353 = vld [vmem:[%s4 + $0xe0] sm:$0xff]
      %v354 = vld [vmem:[%s4 + $0xe8] sm:$0xff]
      %v355 = vld [vmem:[%s4 + $0xf0] sm:$0xff]
      %v356 = vld [vmem:[%s4 + $0xf8] sm:$0xff]
      %357 = vmatprep.subr.mxu0 0.0
      %358 = vmatpush1.msra.mxu0 %v325
      %359 = vmatprep.subr.mxu0 0.0
      %360 = vmatpush1.msra.mxu0 %v326
      %361 = vmatprep.subr.mxu0 0.0
      %362 = vmatpush1.msra.mxu0 %v327
      %363 = vmatprep.subr.mxu0 0.0
      %364 = vmatpush1.msra.mxu0 %v328
      %365 = vmatprep.subr.mxu0 0.0
      %366 = vmatpush1.msra.mxu0 %v329
      %367 = vmatprep.subr.mxu0 0.0
      %368 = vmatpush1.msra.mxu0 %v330
      %369 = vmatprep.subr.mxu0 0.0
      %370 = vmatpush1.msra.mxu0 %v331
      %371 = vmatprep.subr.mxu0 0.0
      %372 = vmatpush1.msra.mxu0 %v332
      %373 = vmatprep.subr.mxu0 0.0
      %374 = vmatpush1.msra.mxu0 %v333
      %375 = vmatprep.subr.mxu0 0.0
      %376 = vmatpush1.msra.mxu0 %v334
      %377 = vmatprep.subr.mxu0 0.0
      %378 = vmatpush1.msra.mxu0 %v335
      %379 = vmatprep.subr.mxu0 0.0
      %380 = vmatpush1.msra.mxu0 %v336
      %381 = vmatprep.subr.mxu0 0.0
      %382 = vmatpush1.msra.mxu0 %v337
      %383 = vmatprep.subr.mxu0 0.0
      %384 = vmatpush1.msra.mxu0 %v338
      %385 = vmatprep.subr.mxu0 0.0
      %386 = vmatpush1.msra.mxu0 %v339
      %387 = vmatprep.subr.mxu0 0.0
      %388 = vmatpush1.msra.mxu0 %v340
      %389 = vmatprep.subr.mxu0 0.0
      %390 = vmatpush1.msra.mxu0 %v341
      %391 = vmatprep.subr.mxu0 0.0
      %392 = vmatpush1.msra.mxu0 %v342
      %393 = vmatprep.subr.mxu0 0.0
      %394 = vmatpush1.msra.mxu0 %v343
      %395 = vmatprep.subr.mxu0 0.0
      %396 = vmatpush1.msra.mxu0 %v344
      %397 = vmatprep.subr.mxu0 0.0
      %398 = vmatpush1.msra.mxu0 %v345
      %399 = vmatprep.subr.mxu0 0.0
      %400 = vmatpush1.msra.mxu0 %v346
      %401 = vmatprep.subr.mxu0 0.0
      %402 = vmatpush1.msra.mxu0 %v347
      %403 = vmatprep.subr.mxu0 0.0
      %404 = vmatpush1.msra.mxu0 %v348
      %405 = vmatprep.subr.mxu0 0.0
      %406 = vmatpush1.msra.mxu0 %v349
      %407 = vmatprep.subr.mxu0 0.0
      %408 = vmatpush1.msra.mxu0 %v350
      %409 = vmatprep.subr.mxu0 0.0
      %410 = vmatpush1.msra.mxu0 %v351
      %411 = vmatprep.subr.mxu0 0.0
      %412 = vmatpush1.msra.mxu0 %v352
      %413 = vmatprep.subr.mxu0 0.0
      %414 = vmatpush1.msra.mxu0 %v353
      %415 = vmatprep.subr.mxu0 0.0
      %416 = vmatpush1.msra.mxu0 %v354
      %417 = vmatprep.subr.mxu0 0.0
      %418 = vmatpush1.msra.mxu0 %v355
      %419 = vmatprep.subr.mxu0 0.0
      %420 = vmatpush1.msra.mxu0 %v356
      %421 = vmatprep.mubr.f32.mxu0 %v322
      %422 = vmatmul.mubr.f32.gmra.mrb[0].mxu0 %v321
      %v423 = vpop.f32.mrb[0].mxu0
      %v424 = vadd.f32 0.0, %v423
      %v425 = vpop.f32.mrb[0].mxu0
      %426 = vmatprep.mubr.f32.mxu0 %v324
      %427 = vmatmul.mubr.f32.gmra.mrb[0].mxu0 %v323
      %v428 = vpop.f32.mrb[0].mxu0
      %v429 = vadd.f32 0.0, %v428
      %v430 = vpop.f32.mrb[0].mxu0
      %431 = vdwg.mxu0
      %vm432 = vcmask 130048
      %433 = vst.msk [vmem:[#allocation6] sm:$0xff] %vm432, %v424
      %434 = vst.msk [vmem:[#allocation6 + $0x8] sm:$0xff] %vm432, %v429
    $region33: #{tpu_custom_call.1} parent=1 // pred_fallthru
      _
    // Predicated region
    $region34: #{tpu_custom_call.1} parent=1 // pred_check
      _
    $region35: #{tpu_custom_call.1} parent=1 // pred_check_branch
      %436 = sbr.rel (0) target = $region37
    $region36: #{tpu_custom_call.1} parent=1 // pred_region
      %s438 = ssub.s32 256, 256
      %439 = vsyncadd [#allocation5], %s438
      %s440 = sshll.u32 [#allocation6], 4
      %s441 = int_to_ptr.vmem [resolvable:$true] %s440
      %446 = dma.vmem_to_hbm [thread:$0]  %s441, 256, %s5, [#allocation5], 128, 128, 8
    $region37: #{tpu_custom_call.1} parent=1 // pred_fallthru
      _
    // Predicated region
    $region38: #{tpu_custom_call.1} parent=1 // pred_check
      _
    $region39: #{tpu_custom_call.1} parent=1 // pred_check_branch
      %448 = sbr.rel (0) target = $region41
    $region40: #{tpu_custom_call.1} parent=1 // pred_region
      %449 = dma.done [#allocation5], 256
    $region41: #{tpu_custom_call.1} parent=1 // pred_fallthru
      _
    %450 = vsyncpa [#allocation4], 1
    %451 = vsyncpa [#allocation5], 1

</llo_original>
